<compile_context>
chip_gen: v7x
topology: tpu7x:2x2x1
jax: 0.10.0
libtpu: 0.0.40
codegen_flags: <defaults>
</compile_context>

<pallas_src>
import math

import jax
import jax.numpy as jnp
from jax.experimental import pallas as pl
from jax.experimental.pallas import tpu as pltpu


# Full-array-resident-in-VMEM spec (no grid; everything fits easily).
_VMEM_SPEC = pl.BlockSpec(memory_space=pltpu.MemorySpace.VMEM)

_BN_EPS = 1e-5


# ----------------------------------------------------------------------------
# Standalone GraphConvolution kernel (the spec'd module):
#     out[b] = att @ (x[b] @ W) + bias
# Single pallas_call.  x is passed as a (B*N, Fin) row slab; the att matmul is
# done per batch on sublane-aligned 48-row slices (no lane-axis relayouts).
# ----------------------------------------------------------------------------
def _make_graph_conv_kernel(B, N):
    def kernel(x_ref, w_ref, att_ref, b_ref, o_ref):
        w = w_ref[...]                                    # (Fin, Fout)
        att = att_ref[...]                                # (N, N)
        bias = b_ref[...]                                 # (1, Fout)
        x = x_ref[...]                                    # (B*N, Fin) slab
        # support = x @ W, batched over rows.
        support = jnp.dot(x, w, preferred_element_type=jnp.float32)
        # out = att @ support, per batch on sublane-aligned row slices.
        rows = [jnp.dot(att, support[b * N:(b + 1) * N, :],
                        preferred_element_type=jnp.float32) for b in range(B)]
        out = jnp.concatenate(rows, axis=0) if B > 1 else rows[0]
        # Single full-ref store (bias broadcast once over all B*N rows).
        o_ref[...] = (out + bias).astype(o_ref.dtype)

    return kernel


def graph_conv(x, w, att, bias):
    """GraphConvolution.forward for a whole batch in one fused pallas_call."""
    B, N, Fin = x.shape
    Fout = w.shape[1]
    flops = 2 * B * N * Fin * Fout + 2 * B * N * N * Fout
    bytes_accessed = 4 * (B * N * Fin + Fin * Fout + N * N + Fout + B * N * Fout)
    out = pl.pallas_call(
        _make_graph_conv_kernel(B, N),
        out_shape=jax.ShapeDtypeStruct((B * N, Fout), x.dtype),
        in_specs=[_VMEM_SPEC] * 4,
        out_specs=_VMEM_SPEC,
        cost_estimate=pl.CostEstimate(flops=int(flops), transcendentals=0,
                                      bytes_accessed=int(bytes_accessed)),
    )(x.reshape(B * N, Fin), w, att, bias.reshape(1, Fout))
    return out.reshape(B, N, Fout)


# ----------------------------------------------------------------------------
# Fully fused GCN forward: gc1 -> bn/tanh -> residual blocks -> gc7 (+x)
# in a single pallas_call.  Activations are one (B*N, F) row slab end-to-end.
# ----------------------------------------------------------------------------
def _make_gcn_kernel(B, N, Fin, Fhid, num_stage, is_out_resi):
    inv_b = 1.0 / B
    L = 2 + 2 * num_stage        # number of graph convolutions

    def kernel(x_ref, atts_ref, w_hid_ref, w_in_ref, w_out_ref, b_ref, bn_ref,
               o_ref):
        def mm(a, b):
            return jnp.dot(a, b, preferred_element_type=jnp.float32)

        def att_apply(att, slab):
            # (N, N) @ per-batch row slices; 48-row slices are sublane-aligned.
            rows = [mm(att, slab[b * N:(b + 1) * N, :]) for b in range(B)]
            return jnp.concatenate(rows, axis=0) if B > 1 else rows[0]

        bias_all = b_ref[...]                              # (L, bw) tiny, load once

        def gconv(slab, w, att, li, fin, fout):
            bias = bias_all[li:li + 1, :fout]              # (1, fout) static slice
            if fin < fout:
                # (att @ x) @ W : cheaper contraction order (exact reassociation).
                out = mm(att_apply(att, slab), w)
            else:
                # att @ (x @ W) : PyTorch's order.
                out = att_apply(att, mm(slab, w))
            return out + bias                              # one broadcast per layer

        def bn_tanh(slab, bi):
            # BatchNorm1d(node_n * feat) on the flattened (B, N*F) view:
            # training-mode batch statistics, biased variance, eps=1e-5; + tanh.
            gamma = bn_ref[2 * bi]                         # (N, Fhid)
            beta = bn_ref[2 * bi + 1]                      # (N, Fhid)
            parts = [slab[b * N:(b + 1) * N, :] for b in range(B)]
            mean = parts[0]
            for p in parts[1:]:
                mean = mean + p
            mean = mean * inv_b
            centered = [p - mean for p in parts]           # computed once, reused
            var = centered[0] * centered[0]
            for c in centered[1:]:
                var = var + c * c
            var = var * inv_b
            scale = gamma * jax.lax.rsqrt(var + _BN_EPS)   # gamma folded once (EUP)
            outs = [jnp.tanh(c * scale + beta) for c in centered]
            return jnp.concatenate(outs, axis=0) if B > 1 else outs[0]

        x = x_ref[...]                                     # (B*N, Fin) slab

        y = gconv(x, w_in_ref[...], atts_ref[0], 0, Fin, Fhid)        # gc1
        y = bn_tanh(y, 0)                                              # bn1 + tanh
        # TODO(synk): nn.Dropout is stochastic; treated as identity (p=0 / eval
        # dropout) while BatchNorm uses training-mode batch statistics.

        for s in range(num_stage):                                     # GC_Blocks
            res = y
            y = gconv(y, w_hid_ref[2 * s], atts_ref[1 + 2 * s], 1 + 2 * s,
                      Fhid, Fhid)
            y = bn_tanh(y, 1 + 2 * s)
            y = gconv(y, w_hid_ref[2 * s + 1], atts_ref[2 + 2 * s], 2 + 2 * s,
                      Fhid, Fhid)
            y = bn_tanh(y, 2 + 2 * s)
            y = y + res                                                # block residual

        y = gconv(y, w_out_ref[...], atts_ref[L - 1], L - 1, Fhid, Fin)  # gc7
        if is_out_resi:
            y = y + x                                                  # final residual

        o_ref[...] = y.astype(o_ref.dtype)                 # single full-ref store

    return kernel


def gcn_forward(params, x, is_out_resi=True):
    """Whole GCN forward (GCN.forward semantics) as ONE fused pallas_call."""
    B, N, Fin = x.shape
    Fhid = params["gc1"]["w"].shape[1]
    num_stage = len(params["gcbs"])
    L = 2 + 2 * num_stage
    n_bn = 1 + 2 * num_stage
    bw = max(Fin, Fhid)

    # ---- pack the many tiny parameters into a handful of stacked operands ----
    gcs = [params["gc1"]]
    bns = [params["bn1"]]
    for blk in params["gcbs"]:
        gcs += [blk["gc1"], blk["gc2"]]
        bns += [blk["bn1"], blk["bn2"]]
    gcs.append(params["gc7"])

    atts = jnp.stack([g["att"] for g in gcs])                        # (L, N, N)
    if num_stage > 0:
        w_hid = jnp.stack([g["w"] for g in gcs[1:-1]])               # (2*ns, Fhid, Fhid)
    else:
        w_hid = jnp.zeros((1, Fhid, Fhid), x.dtype)                  # unused placeholder
    w_in = params["gc1"]["w"]                                        # (Fin, Fhid)
    w_out = params["gc7"]["w"]                                       # (Fhid, Fin)

    def _pad_bias(b):
        return jnp.pad(b, (0, bw - b.shape[0]))

    biases = jnp.stack([_pad_bias(g["b"]) for g in gcs])             # (L, bw)
    bn_pack = jnp.stack([arr.reshape(N, Fhid)
                         for bn in bns
                         for arr in (bn["gamma"], bn["beta"])])      # (2*n_bn, N, Fhid)

    # ---- VMEM budget guard (v7x: 64 MiB physical / 32 MiB scoped default) ----
    resident_bytes = 4 * (2 * B * N * bw + atts.size + w_hid.size + w_in.size
                          + w_out.size + biases.size + bn_pack.size)
    if resident_bytes * 4 > 24 * 1024 * 1024:   # 4x headroom for live activations
        raise NotImplementedError(
            "all-layers-resident layout would not fit v7x VMEM; stream atts/"
            "weights per layer via a grid + BlockSpec instead")

    # ---- cost estimate (helps XLA schedule this tiny custom call) ------------
    def _gconv_flops(fin, fout):
        return 2 * B * N * fin * fout + 2 * B * N * N * min(fin, fout)

    flops = (_gconv_flops(Fin, Fhid) + 2 * num_stage * _gconv_flops(Fhid, Fhid)
             + _gconv_flops(Fhid, Fin))
    transcendentals = n_bn * (B * N * Fhid + N * Fhid)
    bytes_accessed = 4 * (2 * B * N * Fin + atts.size + w_hid.size + w_in.size
                          + w_out.size + biases.size + bn_pack.size)

    kernel = _make_gcn_kernel(B, N, Fin, Fhid, num_stage, is_out_resi)
    out = pl.pallas_call(
        kernel,
        out_shape=jax.ShapeDtypeStruct((B * N, Fin), x.dtype),
        in_specs=[_VMEM_SPEC] * 7,
        out_specs=_VMEM_SPEC,
        cost_estimate=pl.CostEstimate(flops=int(flops),
                                      transcendentals=int(transcendentals),
                                      bytes_accessed=int(bytes_accessed)),
    )(x.reshape(B * N, Fin), atts, w_hid, w_in, w_out, biases, bn_pack)
    return out.reshape(B, N, Fin)


# ----------------------------------------------------------------------------
# Parameter initialization (matches GraphConvolution.reset_parameters / BN init)
# ----------------------------------------------------------------------------
def init_graph_conv(key, in_features, out_features, node_n):
    stdv = 1.0 / math.sqrt(out_features)
    k1, k2, k3 = jax.random.split(key, 3)
    return {
        "w": jax.random.uniform(k1, (in_features, out_features), jnp.float32, -stdv, stdv),
        "att": jax.random.uniform(k2, (node_n, node_n), jnp.float32, -stdv, stdv),
        "b": jax.random.uniform(k3, (out_features,), jnp.float32, -stdv, stdv),
    }


def init_bn(dim):
    return {"gamma": jnp.ones((dim,), jnp.float32),
            "beta": jnp.zeros((dim,), jnp.float32)}


def init_gcn(key, input_feature, hidden_feature, num_stage, node_n):
    keys = jax.random.split(key, 2 + 2 * num_stage)
    params = {
        "gc1": init_graph_conv(keys[0], input_feature, hidden_feature, node_n),
        "bn1": init_bn(node_n * hidden_feature),
        "gcbs": [],
        "gc7": init_graph_conv(keys[1], hidden_feature, input_feature, node_n),
    }
    for i in range(num_stage):
        params["gcbs"].append({
            "gc1": init_graph_conv(keys[2 + 2 * i], hidden_feature, hidden_feature, node_n),
            "bn1": init_bn(node_n * hidden_feature),
            "gc2": init_graph_conv(keys[3 + 2 * i], hidden_feature, hidden_feature, node_n),
            "bn2": init_bn(node_n * hidden_feature),
        })
    return params


# ----------------------------------------------------------------------------
# Pure-JAX reference (same math, high-precision matmuls) for sanity checks
# ----------------------------------------------------------------------------
def gcn_forward_ref(params, x, is_out_resi=True):
    hp = jax.lax.Precision.HIGHEST

    def gc(p, y):
        support = jnp.einsum("bnf,fo->bno", y, p["w"], precision=hp)
        return jnp.einsum("nm,bmo->bno", p["att"], support, precision=hp) + p["b"]

    def bn_tanh(p, y):
        b, n, f = y.shape
        yf = y.reshape(b, n * f)
        mean = jnp.mean(yf, axis=0, keepdims=True)
        var = jnp.mean((yf - mean) ** 2, axis=0, keepdims=True)
        yh = (yf - mean) * jax.lax.rsqrt(var + _BN_EPS)
        return jnp.tanh(yh * p["gamma"] + p["beta"]).reshape(b, n, f)

    y = gc(params["gc1"], x)
    y = bn_tanh(params["bn1"], y)
    for blk in params["gcbs"]:
        r = y
        y = gc(blk["gc1"], y)
        y = bn_tanh(blk["bn1"], y)
        y = gc(blk["gc2"], y)
        y = bn_tanh(blk["bn2"], y)
        y = y + r
    y = gc(params["gc7"], y)
    if is_out_resi:
        y = y + x
    return y


if __name__ == "__main__":
    # Shapes consistent with the module defaults:
    #   node_n=48, input_feature=16, hidden_feature=32, num_stage=1.
    # batch=4 keeps the BN batch statistics well-conditioned for the check and
    # fills the W-matmul sublanes better (192 rows).
    B, NODE_N, IN_F, HID_F, NUM_STAGE = 4, 48, 16, 32, 1

    key = jax.random.PRNGKey(0)
    k_param, k_x = jax.random.split(key)
    params = init_gcn(k_param, IN_F, HID_F, NUM_STAGE, NODE_N)
    x = jax.random.normal(k_x, (B, NODE_N, IN_F), jnp.float32)

    # --- standalone GraphConvolution kernel (the spec'd module) -------------
    gc1 = params["gc1"]
    gc_out = jax.block_until_ready(
        jax.jit(graph_conv)(x, gc1["w"], gc1["att"], gc1["b"]))
    gc_ref = jnp.einsum(
        "nm,bmo->bno", gc1["att"],
        jnp.einsum("bnf,fo->bno", x, gc1["w"],
                   precision=jax.lax.Precision.HIGHEST),
        precision=jax.lax.Precision.HIGHEST) + gc1["b"]
    assert gc_out.shape == (B, NODE_N, HID_F), gc_out.shape
    assert bool(jnp.allclose(gc_out, gc_ref, atol=3e-2, rtol=3e-2))

    # --- fully fused GCN forward (one pallas_call for the whole network) ----
    fused = jax.jit(lambda p, xx: gcn_forward(p, xx, is_out_resi=True))
    out = jax.block_until_ready(fused(params, x))
    ref = gcn_forward_ref(params, x, is_out_resi=True)
    assert out.shape == (B, NODE_N, IN_F), out.shape
    assert bool(jnp.all(jnp.isfinite(out)))
    # Training-mode BN amplifies matmul rounding at near-degenerate channels,
    # so use a relative-norm check (still tight enough to catch wiring bugs
    # like swapped gamma/beta or a wrong reassociation).
    rel_err = jnp.linalg.norm(out - ref) / jnp.linalg.norm(ref)
    assert bool(rel_err < 0.1), float(rel_err)

    print("KERNEL_OK")
</pallas_src>

<mosaic_0001>
module attributes {stable_mosaic.version = 11 : i64} {
  func.func @kernel(%arg0: memref<192x16xf32, #tpu.memory_space<vmem>>, %arg1: memref<16x32xf32, #tpu.memory_space<vmem>>, %arg2: memref<48x48xf32, #tpu.memory_space<vmem>>, %arg3: memref<1x32xf32, #tpu.memory_space<vmem>>, %arg4: memref<192x32xf32, #tpu.memory_space<vmem>>) attributes {dimension_semantics = [], scalar_prefetch = 0 : i64, scratch_operands = 0 : i64, tpu.core_type = #tpu.core_type<tc>} {
    %c0 = arith.constant 0 : index
    %c0_0 = arith.constant 0 : index
    %0 = vector.load %arg1[%c0, %c0_0] : memref<16x32xf32, #tpu.memory_space<vmem>>, vector<16x32xf32>
    %c0_1 = arith.constant 0 : index
    %c0_2 = arith.constant 0 : index
    %1 = vector.load %arg2[%c0_1, %c0_2] : memref<48x48xf32, #tpu.memory_space<vmem>>, vector<48x48xf32>
    %c0_3 = arith.constant 0 : index
    %c0_4 = arith.constant 0 : index
    %2 = vector.load %arg3[%c0_3, %c0_4] : memref<1x32xf32, #tpu.memory_space<vmem>>, vector<1x32xf32>
    %c0_5 = arith.constant 0 : index
    %c0_6 = arith.constant 0 : index
    %3 = vector.load %arg0[%c0_5, %c0_6] : memref<192x16xf32, #tpu.memory_space<vmem>>, vector<192x16xf32>
    %cst = arith.constant dense<0.000000e+00> : vector<192x32xf32>
    %4 = tpu.matmul %3, %0, %cst {dimension_numbers = #tpu.dot_dimension_numbers<[1], [0], [0], [1], [0, 0, 1, 1], [], []>} : vector<192x16xf32>, vector<16x32xf32>, vector<192x32xf32> -> vector<192x32xf32>
    %5 = vector.extract_strided_slice %4 {offsets = [0, 0], sizes = [48, 32], strides = [1, 1]} : vector<192x32xf32> to vector<48x32xf32>
    %cst_7 = arith.constant dense<0.000000e+00> : vector<48x32xf32>
    %6 = tpu.matmul %1, %5, %cst_7 {dimension_numbers = #tpu.dot_dimension_numbers<[1], [0], [0], [1], [0, 0, 1, 1], [], []>} : vector<48x48xf32>, vector<48x32xf32>, vector<48x32xf32> -> vector<48x32xf32>
    %7 = vector.extract_strided_slice %4 {offsets = [48, 0], sizes = [48, 32], strides = [1, 1]} : vector<192x32xf32> to vector<48x32xf32>
    %cst_8 = arith.constant dense<0.000000e+00> : vector<48x32xf32>
    %8 = tpu.matmul %1, %7, %cst_8 {dimension_numbers = #tpu.dot_dimension_numbers<[1], [0], [0], [1], [0, 0, 1, 1], [], []>} : vector<48x48xf32>, vector<48x32xf32>, vector<48x32xf32> -> vector<48x32xf32>
    %9 = vector.extract_strided_slice %4 {offsets = [96, 0], sizes = [48, 32], strides = [1, 1]} : vector<192x32xf32> to vector<48x32xf32>
    %cst_9 = arith.constant dense<0.000000e+00> : vector<48x32xf32>
    %10 = tpu.matmul %1, %9, %cst_9 {dimension_numbers = #tpu.dot_dimension_numbers<[1], [0], [0], [1], [0, 0, 1, 1], [], []>} : vector<48x48xf32>, vector<48x32xf32>, vector<48x32xf32> -> vector<48x32xf32>
    %11 = vector.extract_strided_slice %4 {offsets = [144, 0], sizes = [48, 32], strides = [1, 1]} : vector<192x32xf32> to vector<48x32xf32>
    %cst_10 = arith.constant dense<0.000000e+00> : vector<48x32xf32>
    %12 = tpu.matmul %1, %11, %cst_10 {dimension_numbers = #tpu.dot_dimension_numbers<[1], [0], [0], [1], [0, 0, 1, 1], [], []>} : vector<48x48xf32>, vector<48x32xf32>, vector<48x32xf32> -> vector<48x32xf32>
    %13 = tpu.concatenate %6, %8, %10, %12 in 0 : vector<48x32xf32>, vector<48x32xf32>, vector<48x32xf32>, vector<48x32xf32> -> vector<192x32xf32>
    %14 = vector.broadcast %2 : vector<1x32xf32> to vector<192x32xf32>
    %15 = arith.addf %13, %14 : vector<192x32xf32>
    %c0_11 = arith.constant 0 : index
    %c0_12 = arith.constant 0 : index
    %16 = vector.load %arg4[%c0_11, %c0_12] : memref<192x32xf32, #tpu.memory_space<vmem>>, vector<192x32xf32>
    tpu.vector_store %arg4[%c0_11, %c0_12], %15 {strides = array<i32>} : memref<192x32xf32, #tpu.memory_space<vmem>>, vector<192x32xf32>,
    return
  }
}

</mosaic_0001>

<llo_original>
// kernel: graph_conv.1
$region0: #{graph_conv.1}
  #allocation0 [shape = 'u32[]', space=smem, size = 0x4, offset = 0x4, fixed_abs, tag = 'smem constant byte address 0x4 - core index']
  #allocation1 [shape = 'u32[144,128]{1,0:T(1,128)}', space=vmem, size = 0x12000, scoped, tag = 'internal scratch']
  %s0 = inlined_call_operand.vmem [shape: f32[192,16], index: 0, kind: input, shape index: {}]
  %s1 = inlined_call_operand.vmem [shape: f32[16,32], index: 1, kind: input, shape index: {}]
  %s2 = inlined_call_operand.vmem [shape: f32[48,48], index: 2, kind: input, shape index: {}]
  %s3 = inlined_call_operand.vmem [shape: f32[1,32], index: 3, kind: input, shape index: {}]
  %s4 = inlined_call_operand.vmem [shape: f32[192,32], index: 4, kind: output, shape index: {}]
  %s5 = sld [smem:[#allocation0]]
  $region26: #{graph_conv.1} parent=0
    _
  %s7 = ssub.s32 1, %s5
  %s8 = scalar_select 0, %s7, %s5
  // Predicated region
  $region2: #{graph_conv.1} parent=0 // pred_check
    _
  $region3: #{graph_conv.1} parent=0 // pred_check_branch
    %10 = sbr.rel (0) target = $region5
  $region4: #{graph_conv.1} parent=0 // pred_region
    _
  $region5: #{graph_conv.1} parent=0 // pred_fallthru
    _
  // Predicated region
  $region6: #{graph_conv.1} parent=0 // pred_check
    _
  $region7: #{graph_conv.1} parent=0 // pred_check_branch
    %12 = sbr.rel (0) target = $region9
  $region8: #{graph_conv.1} parent=0 // pred_region
    _
  $region9: #{graph_conv.1} parent=0 // pred_fallthru
    _
  // Predicated region
  $region10: #{graph_conv.1} parent=0 // pred_check
    _
  $region11: #{graph_conv.1} parent=0 // pred_check_branch
    %14 = sbr.rel (0) target = $region13
  $region12: #{graph_conv.1} parent=0 // pred_region
    _
  $region13: #{graph_conv.1} parent=0 // pred_fallthru
    _
  // Predicated region
  $region14: #{graph_conv.1} parent=0 // pred_check
    _
  $region15: #{graph_conv.1} parent=0 // pred_check_branch
    %16 = sbr.rel (0) target = $region17
  $region16: #{graph_conv.1} parent=0 // pred_region
    _
  $region17: #{graph_conv.1} parent=0 // pred_fallthru
    _
  %v17 = vld [vmem:[%s1] sm:$0xff]
  %v18 = vld [vmem:[%s1 + $0x8] sm:$0xff]
  %v19 = vld [vmem:[%s2] sm:$0xff]
  %v20 = vld [vmem:[%s2 + $0x8] sm:$0xff]
  %v21 = vld [vmem:[%s2 + $0x10] sm:$0xff]
  %v22 = vld [vmem:[%s2 + $0x18] sm:$0xff]
  %v23 = vld [vmem:[%s2 + $0x20] sm:$0xff]
  %v24 = vld [vmem:[%s2 + $0x28] sm:$0xff]
  %v25 = vld [vmem:[%s3] sm:$0x1]
  %v26 = vld [vmem:[%s0] sm:$0xff]
  %v27 = vld [vmem:[%s0 + $0x8] sm:$0xff]
  %v28 = vld [vmem:[%s0 + $0x10] sm:$0xff]
  %v29 = vld [vmem:[%s0 + $0x18] sm:$0xff]
  %v30 = vld [vmem:[%s0 + $0x20] sm:$0xff]
  %v31 = vld [vmem:[%s0 + $0x28] sm:$0xff]
  %v32 = vld [vmem:[%s0 + $0x30] sm:$0xff]
  %v33 = vld [vmem:[%s0 + $0x38] sm:$0xff]
  %v34 = vld [vmem:[%s0 + $0x40] sm:$0xff]
  %v35 = vld [vmem:[%s0 + $0x48] sm:$0xff]
  %v36 = vld [vmem:[%s0 + $0x50] sm:$0xff]
  %v37 = vld [vmem:[%s0 + $0x58] sm:$0xff]
  %v38 = vld [vmem:[%s0 + $0x60] sm:$0xff]
  %v39 = vld [vmem:[%s0 + $0x68] sm:$0xff]
  %v40 = vld [vmem:[%s0 + $0x70] sm:$0xff]
  %v41 = vld [vmem:[%s0 + $0x78] sm:$0xff]
  %v42 = vld [vmem:[%s0 + $0x80] sm:$0xff]
  %v43 = vld [vmem:[%s0 + $0x88] sm:$0xff]
  %v44 = vld [vmem:[%s0 + $0x90] sm:$0xff]
  %v45 = vld [vmem:[%s0 + $0x98] sm:$0xff]
  %v46 = vld [vmem:[%s0 + $0xa0] sm:$0xff]
  %v47 = vld [vmem:[%s0 + $0xa8] sm:$0xff]
  %v48 = vld [vmem:[%s0 + $0xb0] sm:$0xff]
  %v49 = vld [vmem:[%s0 + $0xb8] sm:$0xff]
  %vm50 = vcmask 130048
  %v52 = vsel %vm50, %v26, 0
  %v55 = vsel %vm50, %v27, 0
  %v58 = vsel %vm50, %v28, 0
  %v61 = vsel %vm50, %v29, 0
  %v64 = vsel %vm50, %v30, 0
  %v67 = vsel %vm50, %v31, 0
  %v70 = vsel %vm50, %v32, 0
  %v73 = vsel %vm50, %v33, 0
  %v76 = vsel %vm50, %v34, 0
  %v79 = vsel %vm50, %v35, 0
  %v82 = vsel %vm50, %v36, 0
  %v85 = vsel %vm50, %v37, 0
  %v88 = vsel %vm50, %v38, 0
  %v91 = vsel %vm50, %v39, 0
  %v94 = vsel %vm50, %v40, 0
  %v97 = vsel %vm50, %v41, 0
  %v100 = vsel %vm50, %v42, 0
  %v103 = vsel %vm50, %v43, 0
  %v106 = vsel %vm50, %v44, 0
  %v109 = vsel %vm50, %v45, 0
  %v112 = vsel %vm50, %v46, 0
  %v115 = vsel %vm50, %v47, 0
  %v118 = vsel %vm50, %v48, 0
  %v121 = vsel %vm50, %v49, 0
  %123 = vmatprep.subr.mxu0 0.0
  %124 = vmatpush1.msra.mxu0 %v17
  %125 = vmatprep.subr.mxu0 0.0
  %126 = vmatpush1.msra.mxu0 %v18
  %127 = vmatprep.subr.mxu0 0.0
  %128 = vmatpush1.msra.mxu0 0.0
  %129 = vmatprep.subr.mxu0 0.0
  %130 = vmatpush1.msra.mxu0 0.0
  %131 = vmatprep.subr.mxu0 0.0
  %132 = vmatpush1.msra.mxu0 0.0
  %133 = vmatprep.subr.mxu0 0.0
  %134 = vmatpush1.msra.mxu0 0.0
  %135 = vmatprep.subr.mxu0 0.0
  %136 = vmatpush1.msra.mxu0 0.0
  %137 = vmatprep.subr.mxu0 0.0
  %138 = vmatpush1.msra.mxu0 0.0
  %139 = vmatprep.subr.mxu0 0.0
  %140 = vmatpush1.msra.mxu0 0.0
  %141 = vmatprep.subr.mxu0 0.0
  %142 = vmatpush1.msra.mxu0 0.0
  %143 = vmatprep.subr.mxu0 0.0
  %144 = vmatpush1.msra.mxu0 0.0
  %145 = vmatprep.subr.mxu0 0.0
  %146 = vmatpush1.msra.mxu0 0.0
  %147 = vmatprep.subr.mxu0 0.0
  %148 = vmatpush1.msra.mxu0 0.0
  %149 = vmatprep.subr.mxu0 0.0
  %150 = vmatpush1.msra.mxu0 0.0
  %151 = vmatprep.subr.mxu0 0.0
  %152 = vmatpush1.msra.mxu0 0.0
  %153 = vmatprep.subr.mxu0 0.0
  %154 = vmatpush1.msra.mxu0 0.0
  %155 = vmatprep.subr.mxu0 0.0
  %156 = vmatpush1.msra.mxu0 0.0
  %157 = vmatprep.subr.mxu0 0.0
  %158 = vmatpush1.msra.mxu0 0.0
  %159 = vmatprep.subr.mxu0 0.0
  %160 = vmatpush1.msra.mxu0 0.0
  %161 = vmatprep.subr.mxu0 0.0
  %162 = vmatpush1.msra.mxu0 0.0
  %163 = vmatprep.subr.mxu0 0.0
  %164 = vmatpush1.msra.mxu0 0.0
  %165 = vmatprep.subr.mxu0 0.0
  %166 = vmatpush1.msra.mxu0 0.0
  %167 = vmatprep.subr.mxu0 0.0
  %168 = vmatpush1.msra.mxu0 0.0
  %169 = vmatprep.subr.mxu0 0.0
  %170 = vmatpush1.msra.mxu0 0.0
  %171 = vmatprep.subr.mxu0 0.0
  %172 = vmatpush1.msra.mxu0 0.0
  %173 = vmatprep.subr.mxu0 0.0
  %174 = vmatpush1.msra.mxu0 0.0
  %175 = vmatprep.subr.mxu0 0.0
  %176 = vmatpush1.msra.mxu0 0.0
  %177 = vmatprep.subr.mxu0 0.0
  %178 = vmatpush1.msra.mxu0 0.0
  %179 = vmatprep.subr.mxu0 0.0
  %180 = vmatpush1.msra.mxu0 0.0
  %181 = vmatprep.subr.mxu0 0.0
  %182 = vmatpush1.msra.mxu0 0.0
  %183 = vmatprep.subr.mxu0 0.0
  %184 = vmatpush1.msra.mxu0 0.0
  %185 = vmatprep.subr.mxu0 0.0
  %186 = vmatpush1.msra.mxu0 0.0
  %187 = vmatprep.mubr.f32.mxu0 0.0
  %188 = vmatmul.mubr.f32.gmra.mrb[0].mxu0 %v52
  %v189 = vpop.f32.mrb[0].mxu0
  %v190 = vadd.f32 0.0, %v189
  %v191 = vpop.f32.mrb[0].mxu0
  %192 = vmatprep.mubr.f32.mxu0 0.0
  %193 = vmatmul.mubr.f32.gmra.mrb[0].mxu0 %v55
  %v194 = vpop.f32.mrb[0].mxu0
  %v195 = vadd.f32 0.0, %v194
  %v196 = vpop.f32.mrb[0].mxu0
  %197 = vmatprep.mubr.f32.mxu0 0.0
  %198 = vmatmul.mubr.f32.gmra.mrb[0].mxu0 %v58
  %v199 = vpop.f32.mrb[0].mxu0
  %v200 = vadd.f32 0.0, %v199
  %v201 = vpop.f32.mrb[0].mxu0
  %202 = vmatprep.mubr.f32.mxu0 0.0
  %203 = vmatmul.mubr.f32.gmra.mrb[0].mxu0 %v61
  %v204 = vpop.f32.mrb[0].mxu0
  %v205 = vadd.f32 0.0, %v204
  %v206 = vpop.f32.mrb[0].mxu0
  %207 = vmatprep.mubr.f32.mxu0 0.0
  %208 = vmatmul.mubr.f32.gmra.mrb[0].mxu0 %v64
  %v209 = vpop.f32.mrb[0].mxu0
  %v210 = vadd.f32 0.0, %v209
  %v211 = vpop.f32.mrb[0].mxu0
  %212 = vmatprep.mubr.f32.mxu0 0.0
  %213 = vmatmul.mubr.f32.gmra.mrb[0].mxu0 %v67
  %v214 = vpop.f32.mrb[0].mxu0
  %v215 = vadd.f32 0.0, %v214
  %v216 = vpop.f32.mrb[0].mxu0
  %217 = vmatprep.mubr.f32.mxu0 0.0
  %218 = vmatmul.mubr.f32.gmra.mrb[0].mxu0 %v70
  %v219 = vpop.f32.mrb[0].mxu0
  %v220 = vadd.f32 0.0, %v219
  %v221 = vpop.f32.mrb[0].mxu0
  %222 = vmatprep.mubr.f32.mxu0 0.0
  %223 = vmatmul.mubr.f32.gmra.mrb[0].mxu0 %v73
  %v224 = vpop.f32.mrb[0].mxu0
  %v225 = vadd.f32 0.0, %v224
  %v226 = vpop.f32.mrb[0].mxu0
  %227 = vmatprep.mubr.f32.mxu0 0.0
  %228 = vmatmul.mubr.f32.gmra.mrb[0].mxu0 %v76
  %v229 = vpop.f32.mrb[0].mxu0
  %v230 = vadd.f32 0.0, %v229
  %v231 = vpop.f32.mrb[0].mxu0
  %232 = vmatprep.mubr.f32.mxu0 0.0
  %233 = vmatmul.mubr.f32.gmra.mrb[0].mxu0 %v79
  %v234 = vpop.f32.mrb[0].mxu0
  %v235 = vadd.f32 0.0, %v234
  %v236 = vpop.f32.mrb[0].mxu0
  %237 = vmatprep.mubr.f32.mxu0 0.0
  %238 = vmatmul.mubr.f32.gmra.mrb[0].mxu0 %v82
  %v239 = vpop.f32.mrb[0].mxu0
  %v240 = vadd.f32 0.0, %v239
  %v241 = vpop.f32.mrb[0].mxu0
  %242 = vmatprep.mubr.f32.mxu0 0.0
  %243 = vmatmul.mubr.f32.gmra.mrb[0].mxu0 %v85
  %v244 = vpop.f32.mrb[0].mxu0
  %v245 = vadd.f32 0.0, %v244
  %v246 = vpop.f32.mrb[0].mxu0
  %247 = vmatprep.mubr.f32.mxu0 0.0
  %248 = vmatmul.mubr.f32.gmra.mrb[0].mxu0 %v88
  %v249 = vpop.f32.mrb[0].mxu0
  %v250 = vadd.f32 0.0, %v249
  %v251 = vpop.f32.mrb[0].mxu0
  %252 = vmatprep.mubr.f32.mxu0 0.0
  %253 = vmatmul.mubr.f32.gmra.mrb[0].mxu0 %v91
  %v254 = vpop.f32.mrb[0].mxu0
  %v255 = vadd.f32 0.0, %v254
  %v256 = vpop.f32.mrb[0].mxu0
  %257 = vmatprep.mubr.f32.mxu0 0.0
  %258 = vmatmul.mubr.f32.gmra.mrb[0].mxu0 %v94
  %v259 = vpop.f32.mrb[0].mxu0
  %v260 = vadd.f32 0.0, %v259
  %v261 = vpop.f32.mrb[0].mxu0
  %262 = vmatprep.mubr.f32.mxu0 0.0
  %263 = vmatmul.mubr.f32.gmra.mrb[0].mxu0 %v97
  %v264 = vpop.f32.mrb[0].mxu0
  %v265 = vadd.f32 0.0, %v264
  %v266 = vpop.f32.mrb[0].mxu0
  %267 = vmatprep.mubr.f32.mxu0 0.0
  %268 = vmatmul.mubr.f32.gmra.mrb[0].mxu0 %v100
  %v269 = vpop.f32.mrb[0].mxu0
  %v270 = vadd.f32 0.0, %v269
  %v271 = vpop.f32.mrb[0].mxu0
  %272 = vmatprep.mubr.f32.mxu0 0.0
  %273 = vmatmul.mubr.f32.gmra.mrb[0].mxu0 %v103
  %v274 = vpop.f32.mrb[0].mxu0
  %v275 = vadd.f32 0.0, %v274
  %v276 = vpop.f32.mrb[0].mxu0
  %277 = vmatprep.mubr.f32.mxu0 0.0
  %278 = vmatmul.mubr.f32.gmra.mrb[0].mxu0 %v106
  %v279 = vpop.f32.mrb[0].mxu0
  %v280 = vadd.f32 0.0, %v279
  %v281 = vpop.f32.mrb[0].mxu0
  %282 = vmatprep.mubr.f32.mxu0 0.0
  %283 = vmatmul.mubr.f32.gmra.mrb[0].mxu0 %v109
  %v284 = vpop.f32.mrb[0].mxu0
  %v285 = vadd.f32 0.0, %v284
  %v286 = vpop.f32.mrb[0].mxu0
  %287 = vmatprep.mubr.f32.mxu0 0.0
  %288 = vmatmul.mubr.f32.gmra.mrb[0].mxu0 %v112
  %v289 = vpop.f32.mrb[0].mxu0
  %v290 = vadd.f32 0.0, %v289
  %v291 = vpop.f32.mrb[0].mxu0
  %292 = vmatprep.mubr.f32.mxu0 0.0
  %293 = vmatmul.mubr.f32.gmra.mrb[0].mxu0 %v115
  %v294 = vpop.f32.mrb[0].mxu0
  %v295 = vadd.f32 0.0, %v294
  %v296 = vpop.f32.mrb[0].mxu0
  %297 = vmatprep.mubr.f32.mxu0 0.0
  %298 = vmatmul.mubr.f32.gmra.mrb[0].mxu0 %v118
  %v299 = vpop.f32.mrb[0].mxu0
  %v300 = vadd.f32 0.0, %v299
  %v301 = vpop.f32.mrb[0].mxu0
  %302 = vmatprep.mubr.f32.mxu0 0.0
  %303 = vmatmul.mubr.f32.gmra.mrb[0].mxu0 %v121
  %v304 = vpop.f32.mrb[0].mxu0
  %v305 = vadd.f32 0.0, %v304
  %v306 = vpop.f32.mrb[0].mxu0
  %307 = vdwg.mxu0
  %vm308 = vcmask 392192
  %v310 = vsel %vm308, %v19, 0
  %v313 = vsel %vm308, %v20, 0
  %v316 = vsel %vm308, %v21, 0
  %v319 = vsel %vm308, %v22, 0
  %v322 = vsel %vm308, %v23, 0
  %v325 = vsel %vm308, %v24, 0
  %327 = vmatprep.subr.mxu0 0.0
  %328 = vmatpush1.msra.mxu0 %v190
  %329 = vmatprep.subr.mxu0 0.0
  %330 = vmatpush1.msra.mxu0 %v195
  %331 = vmatprep.subr.mxu0 0.0
  %332 = vmatpush1.msra.mxu0 %v200
  %333 = vmatprep.subr.mxu0 0.0
  %334 = vmatpush1.msra.mxu0 %v205
  %335 = vmatprep.subr.mxu0 0.0
  %336 = vmatpush1.msra.mxu0 %v210
  %337 = vmatprep.subr.mxu0 0.0
  %338 = vmatpush1.msra.mxu0 %v215
  %339 = vmatprep.subr.mxu0 0.0
  %340 = vmatpush1.msra.mxu0 0.0
  %341 = vmatprep.subr.mxu0 0.0
  %342 = vmatpush1.msra.mxu0 0.0
  %343 = vmatprep.subr.mxu0 0.0
  %344 = vmatpush1.msra.mxu0 0.0
  %345 = vmatprep.subr.mxu0 0.0
  %346 = vmatpush1.msra.mxu0 0.0
  %347 = vmatprep.subr.mxu0 0.0
  %348 = vmatpush1.msra.mxu0 0.0
  %349 = vmatprep.subr.mxu0 0.0
  %350 = vmatpush1.msra.mxu0 0.0
  %351 = vmatprep.subr.mxu0 0.0
  %352 = vmatpush1.msra.mxu0 0.0
  %353 = vmatprep.subr.mxu0 0.0
  %354 = vmatpush1.msra.mxu0 0.0
  %355 = vmatprep.subr.mxu0 0.0
  %356 = vmatpush1.msra.mxu0 0.0
  %357 = vmatprep.subr.mxu0 0.0
  %358 = vmatpush1.msra.mxu0 0.0
  %359 = vmatprep.subr.mxu0 0.0
  %360 = vmatpush1.msra.mxu0 0.0
  %361 = vmatprep.subr.mxu0 0.0
  %362 = vmatpush1.msra.mxu0 0.0
  %363 = vmatprep.subr.mxu0 0.0
  %364 = vmatpush1.msra.mxu0 0.0
  %365 = vmatprep.subr.mxu0 0.0
  %366 = vmatpush1.msra.mxu0 0.0
  %367 = vmatprep.subr.mxu0 0.0
  %368 = vmatpush1.msra.mxu0 0.0
  %369 = vmatprep.subr.mxu0 0.0
  %370 = vmatpush1.msra.mxu0 0.0
  %371 = vmatprep.subr.mxu0 0.0
  %372 = vmatpush1.msra.mxu0 0.0
  %373 = vmatprep.subr.mxu0 0.0
  %374 = vmatpush1.msra.mxu0 0.0
  %375 = vmatprep.subr.mxu0 0.0
  %376 = vmatpush1.msra.mxu0 0.0
  %377 = vmatprep.subr.mxu0 0.0
  %378 = vmatpush1.msra.mxu0 0.0
  %379 = vmatprep.subr.mxu0 0.0
  %380 = vmatpush1.msra.mxu0 0.0
  %381 = vmatprep.subr.mxu0 0.0
  %382 = vmatpush1.msra.mxu0 0.0
  %383 = vmatprep.subr.mxu0 0.0
  %384 = vmatpush1.msra.mxu0 0.0
  %385 = vmatprep.subr.mxu0 0.0
  %386 = vmatpush1.msra.mxu0 0.0
  %387 = vmatprep.subr.mxu0 0.0
  %388 = vmatpush1.msra.mxu0 0.0
  %389 = vmatprep.subr.mxu0 0.0
  %390 = vmatpush1.msra.mxu0 0.0
  %391 = vmatprep.mubr.f32.mxu0 0.0
  %392 = vmatmul.mubr.f32.gmra.mrb[0].mxu0 %v310
  %v393 = vpop.f32.mrb[0].mxu0
  %v394 = vadd.f32 0.0, %v393
  %v395 = vpop.f32.mrb[0].mxu0
  %396 = vmatprep.mubr.f32.mxu0 0.0
  %397 = vmatmul.mubr.f32.gmra.mrb[0].mxu0 %v313
  %v398 = vpop.f32.mrb[0].mxu0
  %v399 = vadd.f32 0.0, %v398
  %v400 = vpop.f32.mrb[0].mxu0
  %401 = vmatprep.mubr.f32.mxu0 0.0
  %402 = vmatmul.mubr.f32.gmra.mrb[0].mxu0 %v316
  %v403 = vpop.f32.mrb[0].mxu0
  %v404 = vadd.f32 0.0, %v403
  %v405 = vpop.f32.mrb[0].mxu0
  %406 = vmatprep.mubr.f32.mxu0 0.0
  %407 = vmatmul.mubr.f32.gmra.mrb[0].mxu0 %v319
  %v408 = vpop.f32.mrb[0].mxu0
  %v409 = vadd.f32 0.0, %v408
  %v410 = vpop.f32.mrb[0].mxu0
  %411 = vmatprep.mubr.f32.mxu0 0.0
  %412 = vmatmul.mubr.f32.gmra.mrb[0].mxu0 %v322
  %v413 = vpop.f32.mrb[0].mxu0
  %v414 = vadd.f32 0.0, %v413
  %v415 = vpop.f32.mrb[0].mxu0
  %416 = vmatprep.mubr.f32.mxu0 0.0
  %417 = vmatmul.mubr.f32.gmra.mrb[0].mxu0 %v325
  %v418 = vpop.f32.mrb[0].mxu0
  %v419 = vadd.f32 0.0, %v418
  %v420 = vpop.f32.mrb[0].mxu0
  %421 = vdwg.mxu0
  %422 = vmatprep.subr.mxu0 0.0
  %423 = vmatpush1.msra.mxu0 %v220
  %424 = vmatprep.subr.mxu0 0.0
  %425 = vmatpush1.msra.mxu0 %v225
  %426 = vmatprep.subr.mxu0 0.0
  %427 = vmatpush1.msra.mxu0 %v230
  %428 = vmatprep.subr.mxu0 0.0
  %429 = vmatpush1.msra.mxu0 %v235
  %430 = vmatprep.subr.mxu0 0.0
  %431 = vmatpush1.msra.mxu0 %v240
  %432 = vmatprep.subr.mxu0 0.0
  %433 = vmatpush1.msra.mxu0 %v245
  %434 = vmatprep.subr.mxu0 0.0
  %435 = vmatpush1.msra.mxu0 0.0
  %436 = vmatprep.subr.mxu0 0.0
  %437 = vmatpush1.msra.mxu0 0.0
  %438 = vmatprep.subr.mxu0 0.0
  %439 = vmatpush1.msra.mxu0 0.0
  %440 = vmatprep.subr.mxu0 0.0
  %441 = vmatpush1.msra.mxu0 0.0
  %442 = vmatprep.subr.mxu0 0.0
  %443 = vmatpush1.msra.mxu0 0.0
  %444 = vmatprep.subr.mxu0 0.0
  %445 = vmatpush1.msra.mxu0 0.0
  %446 = vmatprep.subr.mxu0 0.0
  %447 = vmatpush1.msra.mxu0 0.0
  %448 = vmatprep.subr.mxu0 0.0
  %449 = vmatpush1.msra.mxu0 0.0
  %450 = vmatprep.subr.mxu0 0.0
  %451 = vmatpush1.msra.mxu0 0.0
  %452 = vmatprep.subr.mxu0 0.0
  %453 = vmatpush1.msra.mxu0 0.0
  %454 = vmatprep.subr.mxu0 0.0
  %455 = vmatpush1.msra.mxu0 0.0
  %456 = vmatprep.subr.mxu0 0.0
  %457 = vmatpush1.msra.mxu0 0.0
  %458 = vmatprep.subr.mxu0 0.0
  %459 = vmatpush1.msra.mxu0 0.0
  %460 = vmatprep.subr.mxu0 0.0
  %461 = vmatpush1.msra.mxu0 0.0
  %462 = vmatprep.subr.mxu0 0.0
  %463 = vmatpush1.msra.mxu0 0.0
  %464 = vmatprep.subr.mxu0 0.0
  %465 = vmatpush1.msra.mxu0 0.0
  %466 = vmatprep.subr.mxu0 0.0
  %467 = vmatpush1.msra.mxu0 0.0
  %468 = vmatprep.subr.mxu0 0.0
  %469 = vmatpush1.msra.mxu0 0.0
  %470 = vmatprep.subr.mxu0 0.0
  %471 = vmatpush1.msra.mxu0 0.0
  %472 = vmatprep.subr.mxu0 0.0
  %473 = vmatpush1.msra.mxu0 0.0
  %474 = vmatprep.subr.mxu0 0.0
  %475 = vmatpush1.msra.mxu0 0.0
  %476 = vmatprep.subr.mxu0 0.0
  %477 = vmatpush1.msra.mxu0 0.0
  %478 = vmatprep.subr.mxu0 0.0
  %479 = vmatpush1.msra.mxu0 0.0
  %480 = vmatprep.subr.mxu0 0.0
  %481 = vmatpush1.msra.mxu0 0.0
  %482 = vmatprep.subr.mxu0 0.0
  %483 = vmatpush1.msra.mxu0 0.0
  %484 = vmatprep.subr.mxu0 0.0
  %485 = vmatpush1.msra.mxu0 0.0
  %486 = vmatprep.mubr.f32.mxu0 0.0
  %487 = vmatmul.mubr.f32.gmra.mrb[0].mxu0 %v310
  %v488 = vpop.f32.mrb[0].mxu0
  %v489 = vadd.f32 0.0, %v488
  %v490 = vpop.f32.mrb[0].mxu0
  %491 = vmatprep.mubr.f32.mxu0 0.0
  %492 = vmatmul.mubr.f32.gmra.mrb[0].mxu0 %v313
  %v493 = vpop.f32.mrb[0].mxu0
  %v494 = vadd.f32 0.0, %v493
  %v495 = vpop.f32.mrb[0].mxu0
  %496 = vmatprep.mubr.f32.mxu0 0.0
  %497 = vmatmul.mubr.f32.gmra.mrb[0].mxu0 %v316
  %v498 = vpop.f32.mrb[0].mxu0
  %v499 = vadd.f32 0.0, %v498
  %v500 = vpop.f32.mrb[0].mxu0
  %501 = vmatprep.mubr.f32.mxu0 0.0
  %502 = vmatmul.mubr.f32.gmra.mrb[0].mxu0 %v319
  %v503 = vpop.f32.mrb[0].mxu0
  %v504 = vadd.f32 0.0, %v503
  %v505 = vpop.f32.mrb[0].mxu0
  %506 = vmatprep.mubr.f32.mxu0 0.0
  %507 = vmatmul.mubr.f32.gmra.mrb[0].mxu0 %v322
  %v508 = vpop.f32.mrb[0].mxu0
  %v509 = vadd.f32 0.0, %v508
  %v510 = vpop.f32.mrb[0].mxu0
  %511 = vmatprep.mubr.f32.mxu0 0.0
  %512 = vmatmul.mubr.f32.gmra.mrb[0].mxu0 %v325
  %v513 = vpop.f32.mrb[0].mxu0
  %v514 = vadd.f32 0.0, %v513
  %v515 = vpop.f32.mrb[0].mxu0
  %516 = vdwg.mxu0
  %517 = vmatprep.subr.mxu0 0.0
  %518 = vmatpush1.msra.mxu0 %v250
  %519 = vmatprep.subr.mxu0 0.0
  %520 = vmatpush1.msra.mxu0 %v255
  %521 = vmatprep.subr.mxu0 0.0
  %522 = vmatpush1.msra.mxu0 %v260
  %523 = vmatprep.subr.mxu0 0.0
  %524 = vmatpush1.msra.mxu0 %v265
  %525 = vmatprep.subr.mxu0 0.0
  %526 = vmatpush1.msra.mxu0 %v270
  %527 = vmatprep.subr.mxu0 0.0
  %528 = vmatpush1.msra.mxu0 %v275
  %529 = vmatprep.subr.mxu0 0.0
  %530 = vmatpush1.msra.mxu0 0.0
  %531 = vmatprep.subr.mxu0 0.0
  %532 = vmatpush1.msra.mxu0 0.0
  %533 = vmatprep.subr.mxu0 0.0
  %534 = vmatpush1.msra.mxu0 0.0
  %535 = vmatprep.subr.mxu0 0.0
  %536 = vmatpush1.msra.mxu0 0.0
  %537 = vmatprep.subr.mxu0 0.0
  %538 = vmatpush1.msra.mxu0 0.0
  %539 = vmatprep.subr.mxu0 0.0
  %540 = vmatpush1.msra.mxu0 0.0
  %541 = vmatprep.subr.mxu0 0.0
  %542 = vmatpush1.msra.mxu0 0.0
  %543 = vmatprep.subr.mxu0 0.0
  %544 = vmatpush1.msra.mxu0 0.0
  %545 = vmatprep.subr.mxu0 0.0
  %546 = vmatpush1.msra.mxu0 0.0
  %547 = vmatprep.subr.mxu0 0.0
  %548 = vmatpush1.msra.mxu0 0.0
  %549 = vmatprep.subr.mxu0 0.0
  %550 = vmatpush1.msra.mxu0 0.0
  %551 = vmatprep.subr.mxu0 0.0
  %552 = vmatpush1.msra.mxu0 0.0
  %553 = vmatprep.subr.mxu0 0.0
  %554 = vmatpush1.msra.mxu0 0.0
  %555 = vmatprep.subr.mxu0 0.0
  %556 = vmatpush1.msra.mxu0 0.0
  %557 = vmatprep.subr.mxu0 0.0
  %558 = vmatpush1.msra.mxu0 0.0
  %559 = vmatprep.subr.mxu0 0.0
  %560 = vmatpush1.msra.mxu0 0.0
  %561 = vmatprep.subr.mxu0 0.0
  %562 = vmatpush1.msra.mxu0 0.0
  %563 = vmatprep.subr.mxu0 0.0
  %564 = vmatpush1.msra.mxu0 0.0
  %565 = vmatprep.subr.mxu0 0.0
  %566 = vmatpush1.msra.mxu0 0.0
  %567 = vmatprep.subr.mxu0 0.0
  %568 = vmatpush1.msra.mxu0 0.0
  %569 = vmatprep.subr.mxu0 0.0
  %570 = vmatpush1.msra.mxu0 0.0
  %571 = vmatprep.subr.mxu0 0.0
  %572 = vmatpush1.msra.mxu0 0.0
  %573 = vmatprep.subr.mxu0 0.0
  %574 = vmatpush1.msra.mxu0 0.0
  %575 = vmatprep.subr.mxu0 0.0
  %576 = vmatpush1.msra.mxu0 0.0
  %577 = vmatprep.subr.mxu0 0.0
  %578 = vmatpush1.msra.mxu0 0.0
  %579 = vmatprep.subr.mxu0 0.0
  %580 = vmatpush1.msra.mxu0 0.0
  %581 = vmatprep.mubr.f32.mxu0 0.0
  %582 = vmatmul.mubr.f32.gmra.mrb[0].mxu0 %v310
  %v583 = vpop.f32.mrb[0].mxu0
  %v584 = vadd.f32 0.0, %v583
  %v585 = vpop.f32.mrb[0].mxu0
  %586 = vmatprep.mubr.f32.mxu0 0.0
  %587 = vmatmul.mubr.f32.gmra.mrb[0].mxu0 %v313
  %v588 = vpop.f32.mrb[0].mxu0
  %v589 = vadd.f32 0.0, %v588
  %v590 = vpop.f32.mrb[0].mxu0
  %591 = vmatprep.mubr.f32.mxu0 0.0
  %592 = vmatmul.mubr.f32.gmra.mrb[0].mxu0 %v316
  %v593 = vpop.f32.mrb[0].mxu0
  %v594 = vadd.f32 0.0, %v593
  %v595 = vpop.f32.mrb[0].mxu0
  %596 = vmatprep.mubr.f32.mxu0 0.0
  %597 = vmatmul.mubr.f32.gmra.mrb[0].mxu0 %v319
  %v598 = vpop.f32.mrb[0].mxu0
  %v599 = vadd.f32 0.0, %v598
  %v600 = vpop.f32.mrb[0].mxu0
  %601 = vmatprep.mubr.f32.mxu0 0.0
  %602 = vmatmul.mubr.f32.gmra.mrb[0].mxu0 %v322
  %v603 = vpop.f32.mrb[0].mxu0
  %v604 = vadd.f32 0.0, %v603
  %v605 = vpop.f32.mrb[0].mxu0
  %606 = vmatprep.mubr.f32.mxu0 0.0
  %607 = vmatmul.mubr.f32.gmra.mrb[0].mxu0 %v325
  %v608 = vpop.f32.mrb[0].mxu0
  %v609 = vadd.f32 0.0, %v608
  %v610 = vpop.f32.mrb[0].mxu0
  %611 = vdwg.mxu0
  %612 = vmatprep.subr.mxu0 0.0
  %613 = vmatpush1.msra.mxu0 %v280
  %614 = vmatprep.subr.mxu0 0.0
  %615 = vmatpush1.msra.mxu0 %v285
  %616 = vmatprep.subr.mxu0 0.0
  %617 = vmatpush1.msra.mxu0 %v290
  %618 = vmatprep.subr.mxu0 0.0
  %619 = vmatpush1.msra.mxu0 %v295
  %620 = vmatprep.subr.mxu0 0.0
  %621 = vmatpush1.msra.mxu0 %v300
  %622 = vmatprep.subr.mxu0 0.0
  %623 = vmatpush1.msra.mxu0 %v305
  %624 = vmatprep.subr.mxu0 0.0
  %625 = vmatpush1.msra.mxu0 0.0
  %626 = vmatprep.subr.mxu0 0.0
  %627 = vmatpush1.msra.mxu0 0.0
  %628 = vmatprep.subr.mxu0 0.0
  %629 = vmatpush1.msra.mxu0 0.0
  %630 = vmatprep.subr.mxu0 0.0
  %631 = vmatpush1.msra.mxu0 0.0
  %632 = vmatprep.subr.mxu0 0.0
  %633 = vmatpush1.msra.mxu0 0.0
  %634 = vmatprep.subr.mxu0 0.0
  %635 = vmatpush1.msra.mxu0 0.0
  %636 = vmatprep.subr.mxu0 0.0
  %637 = vmatpush1.msra.mxu0 0.0
  %638 = vmatprep.subr.mxu0 0.0
  %639 = vmatpush1.msra.mxu0 0.0
  %640 = vmatprep.subr.mxu0 0.0
  %641 = vmatpush1.msra.mxu0 0.0
  %642 = vmatprep.subr.mxu0 0.0
  %643 = vmatpush1.msra.mxu0 0.0
  %644 = vmatprep.subr.mxu0 0.0
  %645 = vmatpush1.msra.mxu0 0.0
  %646 = vmatprep.subr.mxu0 0.0
  %647 = vmatpush1.msra.mxu0 0.0
  %648 = vmatprep.subr.mxu0 0.0
  %649 = vmatpush1.msra.mxu0 0.0
  %650 = vmatprep.subr.mxu0 0.0
  %651 = vmatpush1.msra.mxu0 0.0
  %652 = vmatprep.subr.mxu0 0.0
  %653 = vmatpush1.msra.mxu0 0.0
  %654 = vmatprep.subr.mxu0 0.0
  %655 = vmatpush1.msra.mxu0 0.0
  %656 = vmatprep.subr.mxu0 0.0
  %657 = vmatpush1.msra.mxu0 0.0
  %658 = vmatprep.subr.mxu0 0.0
  %659 = vmatpush1.msra.mxu0 0.0
  %660 = vmatprep.subr.mxu0 0.0
  %661 = vmatpush1.msra.mxu0 0.0
  %662 = vmatprep.subr.mxu0 0.0
  %663 = vmatpush1.msra.mxu0 0.0
  %664 = vmatprep.subr.mxu0 0.0
  %665 = vmatpush1.msra.mxu0 0.0
  %666 = vmatprep.subr.mxu0 0.0
  %667 = vmatpush1.msra.mxu0 0.0
  %668 = vmatprep.subr.mxu0 0.0
  %669 = vmatpush1.msra.mxu0 0.0
  %670 = vmatprep.subr.mxu0 0.0
  %671 = vmatpush1.msra.mxu0 0.0
  %672 = vmatprep.subr.mxu0 0.0
  %673 = vmatpush1.msra.mxu0 0.0
  %674 = vmatprep.subr.mxu0 0.0
  %675 = vmatpush1.msra.mxu0 0.0
  %676 = vmatprep.mubr.f32.mxu0 0.0
  %677 = vmatmul.mubr.f32.gmra.mrb[0].mxu0 %v310
  %v678 = vpop.f32.mrb[0].mxu0
  %v679 = vadd.f32 0.0, %v678
  %v680 = vpop.f32.mrb[0].mxu0
  %681 = vmatprep.mubr.f32.mxu0 0.0
  %682 = vmatmul.mubr.f32.gmra.mrb[0].mxu0 %v313
  %v683 = vpop.f32.mrb[0].mxu0
  %v684 = vadd.f32 0.0, %v683
  %v685 = vpop.f32.mrb[0].mxu0
  %686 = vmatprep.mubr.f32.mxu0 0.0
  %687 = vmatmul.mubr.f32.gmra.mrb[0].mxu0 %v316
  %v688 = vpop.f32.mrb[0].mxu0
  %v689 = vadd.f32 0.0, %v688
  %v690 = vpop.f32.mrb[0].mxu0
  %691 = vmatprep.mubr.f32.mxu0 0.0
  %692 = vmatmul.mubr.f32.gmra.mrb[0].mxu0 %v319
  %v693 = vpop.f32.mrb[0].mxu0
  %v694 = vadd.f32 0.0, %v693
  %v695 = vpop.f32.mrb[0].mxu0
  %696 = vmatprep.mubr.f32.mxu0 0.0
  %697 = vmatmul.mubr.f32.gmra.mrb[0].mxu0 %v322
  %v698 = vpop.f32.mrb[0].mxu0
  %v699 = vadd.f32 0.0, %v698
  %v700 = vpop.f32.mrb[0].mxu0
  %701 = vmatprep.mubr.f32.mxu0 0.0
  %702 = vmatmul.mubr.f32.gmra.mrb[0].mxu0 %v325
  %v703 = vpop.f32.mrb[0].mxu0
  %v704 = vadd.f32 0.0, %v703
  %v705 = vpop.f32.mrb[0].mxu0
  %706 = vdwg.mxu0
  %v708 = vlaneseq
  %v709 = vshrl.u32 %v708, 7
  %v710 = vsub.s32 0, %v709
  %v711 = vrot.slane %v25, %v710
  %v713 = vadd.f32 %v394, %v711
  %v714 = vadd.f32 %v399, %v711
  %v715 = vadd.f32 %v404, %v711
  %v716 = vadd.f32 %v409, %v711
  %v717 = vadd.f32 %v414, %v711
  %v718 = vadd.f32 %v419, %v711
  %v719 = vadd.f32 %v489, %v711
  %v720 = vadd.f32 %v494, %v711
  %v721 = vadd.f32 %v499, %v711
  %v722 = vadd.f32 %v504, %v711
  %v723 = vadd.f32 %v509, %v711
  %v724 = vadd.f32 %v514, %v711
  %v725 = vadd.f32 %v584, %v711
  %v726 = vadd.f32 %v589, %v711
  %v727 = vadd.f32 %v594, %v711
  %v728 = vadd.f32 %v599, %v711
  %v729 = vadd.f32 %v604, %v711
  %v730 = vadd.f32 %v609, %v711
  %v731 = vadd.f32 %v679, %v711
  %v732 = vadd.f32 %v684, %v711
  %v733 = vadd.f32 %v689, %v711
  %v734 = vadd.f32 %v694, %v711
  %v735 = vadd.f32 %v699, %v711
  %v736 = vadd.f32 %v704, %v711
  %vm737 = vcmask 261120
  %738 = vst.msk [vmem:[%s4] sm:$0xff] %vm737, %v713
  %739 = vst.msk [vmem:[%s4 + $0x8] sm:$0xff] %vm737, %v714
  %740 = vst.msk [vmem:[%s4 + $0x10] sm:$0xff] %vm737, %v715
  %741 = vst.msk [vmem:[%s4 + $0x18] sm:$0xff] %vm737, %v716
  %742 = vst.msk [vmem:[%s4 + $0x20] sm:$0xff] %vm737, %v717
  %743 = vst.msk [vmem:[%s4 + $0x28] sm:$0xff] %vm737, %v718
  %744 = vst.msk [vmem:[%s4 + $0x30] sm:$0xff] %vm737, %v719
  %745 = vst.msk [vmem:[%s4 + $0x38] sm:$0xff] %vm737, %v720
  %746 = vst.msk [vmem:[%s4 + $0x40] sm:$0xff] %vm737, %v721
  %747 = vst.msk [vmem:[%s4 + $0x48] sm:$0xff] %vm737, %v722
  %748 = vst.msk [vmem:[%s4 + $0x50] sm:$0xff] %vm737, %v723
  %749 = vst.msk [vmem:[%s4 + $0x58] sm:$0xff] %vm737, %v724
  %750 = vst.msk [vmem:[%s4 + $0x60] sm:$0xff] %vm737, %v725
  %751 = vst.msk [vmem:[%s4 + $0x68] sm:$0xff] %vm737, %v726
  %752 = vst.msk [vmem:[%s4 + $0x70] sm:$0xff] %vm737, %v727
  %753 = vst.msk [vmem:[%s4 + $0x78] sm:$0xff] %vm737, %v728
  %754 = vst.msk [vmem:[%s4 + $0x80] sm:$0xff] %vm737, %v729
  %755 = vst.msk [vmem:[%s4 + $0x88] sm:$0xff] %vm737, %v730
  %756 = vst.msk [vmem:[%s4 + $0x90] sm:$0xff] %vm737, %v731
  %757 = vst.msk [vmem:[%s4 + $0x98] sm:$0xff] %vm737, %v732
  %758 = vst.msk [vmem:[%s4 + $0xa0] sm:$0xff] %vm737, %v733
  %759 = vst.msk [vmem:[%s4 + $0xa8] sm:$0xff] %vm737, %v734
  %760 = vst.msk [vmem:[%s4 + $0xb0] sm:$0xff] %vm737, %v735
  %761 = vst.msk [vmem:[%s4 + $0xb8] sm:$0xff] %vm737, %v736
  // Predicated region
  $region18: #{graph_conv.1} parent=0 // pred_check
    _
  $region19: #{graph_conv.1} parent=0 // pred_check_branch
    %763 = sbr.rel (0) target = $region21
  $region20: #{graph_conv.1} parent=0 // pred_region
    _
  $region21: #{graph_conv.1} parent=0 // pred_fallthru
    _
  // Predicated region
  $region22: #{graph_conv.1} parent=0 // pred_check
    _
  $region23: #{graph_conv.1} parent=0 // pred_check_branch
    %765 = sbr.rel (0) target = $region25
  $region24: #{graph_conv.1} parent=0 // pred_region
    _
  $region25: #{graph_conv.1} parent=0 // pred_fallthru
    _

</llo_original>
